<compile_context>
chip_gen: v7x
topology: tpu7x:2x2x1
jax: 0.10.0
libtpu: 0.0.40
codegen_flags: <defaults>
</compile_context>

<pallas_src>
import jax
import jax.numpy as jnp
from jax.experimental import pallas as pl
from jax.experimental.pallas import tpu as pltpu


def _rot_matmul_kernel(w_ref, x_ref, o_ref):
    # w_ref: [RS3P, C] (resident), x_ref: [C, TN], o_ref: [RS3P, TN]
    o_ref[...] = jnp.dot(
        w_ref[...], x_ref[...], preferred_element_type=jnp.float32
    ).astype(o_ref.dtype)


def _round_up(v, m):
    return -(-v // m) * m


def simple_rot_partial_forward(
    x,
    weights,
    which_strict_rot="None",
    *,
    compute_dtype=None,   # e.g. jnp.bfloat16 on v6e/v7x; None -> x.dtype
    tile_n=512,           # lane-tile size (multiple of 128); 512-2048 is the sweet spot
    use_pallas=None,      # None -> auto (skip Pallas for tiny problems)
):
    """x: [B, in_ch, 3, 1]; weights: [rot_samples, 3, in_ch] -> [rot_samples, B, 3, 3]."""
    if which_strict_rot != "None":
        # TODO(synk): pc_utils.to_rotation_mat (orthogonality projection) not ported.
        raise NotImplementedError(
            "SimpleRot_Partial Pallas port only supports which_strict_rot='None'"
        )

    B, C, D, N = x.shape
    assert D == 3 and N == 1, "SimpleRot_Partial expects x of shape [B, in_ch, 3, 1]"
    RS = weights.shape[0]
    n_lanes = B * 3

    # Small-problem guard: pallas_call dispatch + padding glue costs far more
    # than a ~few-thousand-MAC matmul; let XLA's dot handle it.
    if use_pallas is None:
        use_pallas = n_lanes >= 256
    if not use_pallas:
        return jnp.einsum("ioc,bcd->ibod", weights, x[..., 0]).astype(x.dtype)

    cdt = x.dtype if compute_dtype is None else compute_dtype

    # Weights: [RS, 3, C] -> [RS*3, C], pad rows to a multiple of 8 sublanes.
    w_all = weights.reshape(RS * 3, C)
    rs3_pad = _round_up(RS * 3, 8)
    if rs3_pad != RS * 3:
        w_all = jnp.pad(w_all, ((0, rs3_pad - RS * 3), (0, 0)))

    # x: [B, C, 3, 1] -> [C, B*3] channels-major (lane axis = B*3).
    x_mat = jnp.transpose(x[..., 0], (1, 0, 2)).reshape(C, n_lanes)

    # Lane-dense padding: pad B*3 up to a multiple of the (128-aligned) tile.
    tn = max(128, (min(tile_n, _round_up(n_lanes, 128)) // 128) * 128)
    n_pad = _round_up(n_lanes, tn)
    if n_pad != n_lanes:
        x_mat = jnp.pad(x_mat, ((0, 0), (0, n_pad - n_lanes)))

    w_c = w_all.astype(cdt)
    x_c = x_mat.astype(cdt)

    grid = (n_pad // tn,)
    out = pl.pallas_call(
        _rot_matmul_kernel,
        out_shape=jax.ShapeDtypeStruct((rs3_pad, n_pad), jnp.float32),
        grid=grid,
        in_specs=[
            pl.BlockSpec((rs3_pad, C), lambda i: (0, 0)),  # weight stays resident
            pl.BlockSpec((C, tn), lambda i: (0, i)),       # stream X lane-tiles
        ],
        out_specs=pl.BlockSpec((rs3_pad, tn), lambda i: (0, i)),
        compiler_params=pltpu.CompilerParams(
            # Independent lane-tiles: shard across v7x's 2 TensorCores.
            dimension_semantics=("parallel",),
        ),
    )(w_c, x_c)

    # Strip padding; out[i*3 + o, b*3 + d] -> [RS, B, 3, 3] (PyTorch layout).
    out = out[: RS * 3, :n_lanes]
    rot = out.reshape(RS, 3, B, 3).transpose(0, 2, 1, 3)
    return rot.astype(x.dtype)


def _reference_forward(x, weights):
    # Pure-JAX reference of the PyTorch forward (which_strict_rot='None').
    return jnp.einsum("ioc,bcd->ibod", weights, x[..., 0])


if __name__ == "__main__":
    key = jax.random.PRNGKey(0)
    kx, kw, kx2 = jax.random.split(key, 3)

    in_ch, rot_samples = 32, 5
    bound = 1.0 / jnp.sqrt(jnp.float32(in_ch))
    weights = jax.random.uniform(
        kw, (rot_samples, 3, in_ch), dtype=jnp.float32, minval=-bound, maxval=bound
    )

    # 1) Small shape (B=2), f32 compute, Pallas path forced for coverage.
    B = 2
    x = jax.random.normal(kx, (B, in_ch, 3, 1), dtype=jnp.float32)
    out = simple_rot_partial_forward(x, weights, use_pallas=True)
    out = jax.block_until_ready(out)
    ref = _reference_forward(x, weights)
    assert out.shape == (rot_samples, B, 3, 3), out.shape
    assert jnp.allclose(out, ref, atol=1e-5, rtol=1e-5), "f32 mismatch vs reference"

    # 2) Slightly larger batch, multi-tile grid, bf16 inputs + f32 accumulation.
    B2 = 96  # B*3 = 288 lanes -> 3 lane-tiles of 128
    x2 = jax.random.normal(kx2, (B2, in_ch, 3, 1), dtype=jnp.float32)
    out2 = simple_rot_partial_forward(
        x2, weights, compute_dtype=jnp.bfloat16, tile_n=128, use_pallas=True
    )
    out2 = jax.block_until_ready(out2)
    ref2 = _reference_forward(x2, weights)
    assert out2.shape == (rot_samples, B2, 3, 3), out2.shape
    assert jnp.allclose(out2, ref2, atol=5e-2, rtol=5e-2), "bf16 mismatch vs reference"

    # 3) Auto path at tiny B falls back to einsum (no Pallas overhead).
    out3 = jax.block_until_ready(simple_rot_partial_forward(x, weights))
    assert jnp.allclose(out3, ref, atol=1e-5, rtol=1e-5), "fallback mismatch"

    print("KERNEL_OK")
</pallas_src>

<mosaic_0001>
module attributes {stable_mosaic.version = 11 : i64} {
  func.func @_rot_matmul_kernel(%arg0: i32, %arg1: memref<16x32xf32, #tpu.memory_space<vmem>>, %arg2: memref<32x128xf32, #tpu.memory_space<vmem>>, %arg3: memref<16x128xf32, #tpu.memory_space<vmem>>) attributes {dimension_semantics = [#tpu.dimension_semantics<parallel>], iteration_bounds = array<i64: 1>, scalar_prefetch = 0 : i64, scratch_operands = 0 : i64, tpu.core_type = #tpu.core_type<tc>, window_params = [{pipeline_mode = #tpu.pipeline_mode<synchronous>, transform_indices = @transform_0, window_bounds = array<i64: 16, 32>}, {transform_indices = @transform_1, window_bounds = array<i64: 32, 128>}, {transform_indices = @transform_2, window_bounds = array<i64: 16, 128>}]} {
    %c0 = arith.constant 0 : index
    %c0_0 = arith.constant 0 : index
    %0 = vector.load %arg1[%c0, %c0_0] : memref<16x32xf32, #tpu.memory_space<vmem>>, vector<16x32xf32>
    %c0_1 = arith.constant 0 : index
    %c0_2 = arith.constant 0 : index
    %1 = vector.load %arg2[%c0_1, %c0_2] : memref<32x128xf32, #tpu.memory_space<vmem>>, vector<32x128xf32>
    %cst = arith.constant dense<0.000000e+00> : vector<16x128xf32>
    %2 = tpu.matmul %0, %1, %cst {dimension_numbers = #tpu.dot_dimension_numbers<[1], [0], [0], [1], [0, 0, 1, 1], [], []>} : vector<16x32xf32>, vector<32x128xf32>, vector<16x128xf32> -> vector<16x128xf32>
    %c0_3 = arith.constant 0 : index
    %c0_4 = arith.constant 0 : index
    %3 = vector.load %arg3[%c0_3, %c0_4] : memref<16x128xf32, #tpu.memory_space<vmem>>, vector<16x128xf32>
    tpu.vector_store %arg3[%c0_3, %c0_4], %2 {strides = array<i32>} : memref<16x128xf32, #tpu.memory_space<vmem>>, vector<16x128xf32>,
    return
  }
  func.func @transform_0(%arg0: i32) -> (i32, i32) {
    %c0_i32 = arith.constant 0 : i32
    %c0_i32_0 = arith.constant 0 : i32
    %c0_i32_1 = arith.constant 0 : i32
    return %c0_i32, %c0_i32_0 : i32, i32
  }
  func.func @transform_1(%arg0: i32) -> (i32, i32) {
    %c0_i32 = arith.constant 0 : i32
    %c0_i32_0 = arith.constant 0 : i32
    return %c0_i32, %arg0 : i32, i32
  }
  func.func @transform_2(%arg0: i32) -> (i32, i32) {
    %c0_i32 = arith.constant 0 : i32
    %c0_i32_0 = arith.constant 0 : i32
    return %c0_i32, %arg0 : i32, i32
  }
}

</mosaic_0001>

<llo_original>
// kernel: tpu_custom_call.1
$region0: #{tpu_custom_call.1}
  #allocation0 [shape = 'u32[]', space=smem, size = 0x4, offset = 0x4, fixed_abs, tag = 'smem constant byte address 0x4 - core index']
  #allocation1 [shape = 'u32[144,128]{1,0:T(1,128)}', space=vmem, size = 0x12000, scoped, tag = 'internal scratch']
  %s0 = inlined_call_operand.hbm [shape: f32[16,32], index: 0, kind: input, shape index: {}]
  %s1 = inlined_call_operand.hbm [shape: f32[32,128], index: 1, kind: input, shape index: {}]
  %s2 = inlined_call_operand.hbm [shape: f32[16,128], index: 2, kind: output, shape index: {}]
  %s3 = sld [smem:[#allocation0]]
  $region26: #{tpu_custom_call.1} parent=0
    _
  %s5 = ssub.s32 1, %s3
  %s6 = scalar_select 0, %s5, %s3
  $region1: #{tpu_custom_call.1} parent=0
    #allocation2 [shape = 'u8[8192]{0}', space=vmem, size = 0x2000, scoped, tag = 'input window, operand 0, single buffered']
    #allocation3 [shape = 's32[1]{0}', space=sflag, size = 0x4, scoped, tag = 'scoped memory for tpu_custom_call.1']
    #allocation4 [shape = 's32[1]{0}', space=sflag, size = 0x4, scoped, tag = 'scoped memory for tpu_custom_call.1']
    #allocation5 [shape = 'u8[16384]{0}', space=vmem, size = 0x4000, scoped, tag = 'input window, operand 1, single buffered']
    #allocation6 [shape = 's32[1]{0}', space=sflag, size = 0x4, scoped, tag = 'scoped memory for tpu_custom_call.1']
    #allocation7 [shape = 'u8[8192]{0}', space=vmem, size = 0x2000, scoped, tag = 'output window, operand 0, single buffered']
    %7 = vsyncpa [#allocation3], 0
    %8 = vsyncpa [#allocation6], 0
    %9 = vsyncpa [#allocation4], 0
    // Predicated region
    $region2: #{tpu_custom_call.1} parent=1 // pred_check
      _
    $region3: #{tpu_custom_call.1} parent=1 // pred_check_branch
      %11 = sbr.rel (0) target = $region5
    $region4: #{tpu_custom_call.1} parent=1 // pred_region
      %s13 = ssub.s32 256, 256
      %14 = vsyncadd [#allocation3], %s13
      %s15 = sshll.u32 [#allocation2], 4
      %s16 = int_to_ptr.vmem [resolvable:$true] %s15
      %21 = dma.hbm_to_vmem [thread:$0]  %s0, 256, %s16, [#allocation3], 128, 128, 8
    $region5: #{tpu_custom_call.1} parent=1 // pred_fallthru
      _
    // Predicated region
    $region6: #{tpu_custom_call.1} parent=1 // pred_check
      _
    $region7: #{tpu_custom_call.1} parent=1 // pred_check_branch
      %23 = sbr.rel (0) target = $region9
    $region8: #{tpu_custom_call.1} parent=1 // pred_region
      %s25 = ssub.s32 512, 512
      %26 = vsyncadd [#allocation6], %s25
      %s27 = sshll.u32 [#allocation5], 4
      %s28 = int_to_ptr.vmem [resolvable:$true] %s27
      %33 = dma.hbm_to_vmem [thread:$0]  %s1, 512, %s28, [#allocation6], 128, 128, 8
    $region9: #{tpu_custom_call.1} parent=1 // pred_fallthru
      _
    // Predicated region
    $region10: #{tpu_custom_call.1} parent=1 // pred_check
      _
    $region11: #{tpu_custom_call.1} parent=1 // pred_check_branch
      %35 = sbr.rel (0) target = $region13
    $region12: #{tpu_custom_call.1} parent=1 // pred_region
      %36 = dma.done [#allocation3], 256
    $region13: #{tpu_custom_call.1} parent=1 // pred_fallthru
      _
    // Predicated region
    $region14: #{tpu_custom_call.1} parent=1 // pred_check
      _
    $region15: #{tpu_custom_call.1} parent=1 // pred_check_branch
      %38 = sbr.rel (0) target = $region17
    $region16: #{tpu_custom_call.1} parent=1 // pred_region
      %39 = dma.done [#allocation6], 512
    $region17: #{tpu_custom_call.1} parent=1 // pred_fallthru
      _
    %v40 = vld [vmem:[#allocation2] sm:$0xff]
    %v41 = vld [vmem:[#allocation2 + $0x8] sm:$0xff]
    %v42 = vld [vmem:[#allocation5] sm:$0xff]
    %v43 = vld [vmem:[#allocation5 + $0x8] sm:$0xff]
    %v44 = vld [vmem:[#allocation5 + $0x10] sm:$0xff]
    %v45 = vld [vmem:[#allocation5 + $0x18] sm:$0xff]
    %vm46 = vcmask 261120
    %v48 = vsel %vm46, %v40, 0
    %v51 = vsel %vm46, %v41, 0
    %53 = vmatprep.subr.mxu0 0.0
    %54 = vmatpush1.msra.mxu0 %v42
    %55 = vmatprep.subr.mxu0 0.0
    %56 = vmatpush1.msra.mxu0 %v43
    %57 = vmatprep.subr.mxu0 0.0
    %58 = vmatpush1.msra.mxu0 %v44
    %59 = vmatprep.subr.mxu0 0.0
    %60 = vmatpush1.msra.mxu0 %v45
    %61 = vmatprep.subr.mxu0 0.0
    %62 = vmatpush1.msra.mxu0 0.0
    %63 = vmatprep.subr.mxu0 0.0
    %64 = vmatpush1.msra.mxu0 0.0
    %65 = vmatprep.subr.mxu0 0.0
    %66 = vmatpush1.msra.mxu0 0.0
    %67 = vmatprep.subr.mxu0 0.0
    %68 = vmatpush1.msra.mxu0 0.0
    %69 = vmatprep.subr.mxu0 0.0
    %70 = vmatpush1.msra.mxu0 0.0
    %71 = vmatprep.subr.mxu0 0.0
    %72 = vmatpush1.msra.mxu0 0.0
    %73 = vmatprep.subr.mxu0 0.0
    %74 = vmatpush1.msra.mxu0 0.0
    %75 = vmatprep.subr.mxu0 0.0
    %76 = vmatpush1.msra.mxu0 0.0
    %77 = vmatprep.subr.mxu0 0.0
    %78 = vmatpush1.msra.mxu0 0.0
    %79 = vmatprep.subr.mxu0 0.0
    %80 = vmatpush1.msra.mxu0 0.0
    %81 = vmatprep.subr.mxu0 0.0
    %82 = vmatpush1.msra.mxu0 0.0
    %83 = vmatprep.subr.mxu0 0.0
    %84 = vmatpush1.msra.mxu0 0.0
    %85 = vmatprep.subr.mxu0 0.0
    %86 = vmatpush1.msra.mxu0 0.0
    %87 = vmatprep.subr.mxu0 0.0
    %88 = vmatpush1.msra.mxu0 0.0
    %89 = vmatprep.subr.mxu0 0.0
    %90 = vmatpush1.msra.mxu0 0.0
    %91 = vmatprep.subr.mxu0 0.0
    %92 = vmatpush1.msra.mxu0 0.0
    %93 = vmatprep.subr.mxu0 0.0
    %94 = vmatpush1.msra.mxu0 0.0
    %95 = vmatprep.subr.mxu0 0.0
    %96 = vmatpush1.msra.mxu0 0.0
    %97 = vmatprep.subr.mxu0 0.0
    %98 = vmatpush1.msra.mxu0 0.0
    %99 = vmatprep.subr.mxu0 0.0
    %100 = vmatpush1.msra.mxu0 0.0
    %101 = vmatprep.subr.mxu0 0.0
    %102 = vmatpush1.msra.mxu0 0.0
    %103 = vmatprep.subr.mxu0 0.0
    %104 = vmatpush1.msra.mxu0 0.0
    %105 = vmatprep.subr.mxu0 0.0
    %106 = vmatpush1.msra.mxu0 0.0
    %107 = vmatprep.subr.mxu0 0.0
    %108 = vmatpush1.msra.mxu0 0.0
    %109 = vmatprep.subr.mxu0 0.0
    %110 = vmatpush1.msra.mxu0 0.0
    %111 = vmatprep.subr.mxu0 0.0
    %112 = vmatpush1.msra.mxu0 0.0
    %113 = vmatprep.subr.mxu0 0.0
    %114 = vmatpush1.msra.mxu0 0.0
    %115 = vmatprep.subr.mxu0 0.0
    %116 = vmatpush1.msra.mxu0 0.0
    %117 = vmatprep.mubr.f32.mxu0 0.0
    %118 = vmatmul.mubr.f32.gmra.mrb[0].mxu0 %v48
    %v119 = vpop.f32.mrb[0].mxu0
    %v120 = vadd.f32 0.0, %v119
    %v121 = vpop.f32.mrb[0].mxu0
    %122 = vmatprep.mubr.f32.mxu0 0.0
    %123 = vmatmul.mubr.f32.gmra.mrb[0].mxu0 %v51
    %v124 = vpop.f32.mrb[0].mxu0
    %v125 = vadd.f32 0.0, %v124
    %v126 = vpop.f32.mrb[0].mxu0
    %127 = vdwg.mxu0
    %128 = vst [vmem:[#allocation7] sm:$0xff] %v120
    %129 = vst [vmem:[#allocation7 + $0x8] sm:$0xff] %v125
    // Predicated region
    $region18: #{tpu_custom_call.1} parent=1 // pred_check
      _
    $region19: #{tpu_custom_call.1} parent=1 // pred_check_branch
      %131 = sbr.rel (0) target = $region21
    $region20: #{tpu_custom_call.1} parent=1 // pred_region
      %s133 = ssub.s32 256, 256
      %134 = vsyncadd [#allocation4], %s133
      %s135 = sshll.u32 [#allocation7], 4
      %s136 = int_to_ptr.vmem [resolvable:$true] %s135
      %141 = dma.vmem_to_hbm [thread:$0]  %s136, 256, %s2, [#allocation4], 128, 128, 8
    $region21: #{tpu_custom_call.1} parent=1 // pred_fallthru
      _
    // Predicated region
    $region22: #{tpu_custom_call.1} parent=1 // pred_check
      _
    $region23: #{tpu_custom_call.1} parent=1 // pred_check_branch
      %143 = sbr.rel (0) target = $region25
    $region24: #{tpu_custom_call.1} parent=1 // pred_region
      %144 = dma.done [#allocation4], 256
    $region25: #{tpu_custom_call.1} parent=1 // pred_fallthru
      _
    %145 = vsyncpa [#allocation3], 1
    %146 = vsyncpa [#allocation6], 1
    %147 = vsyncpa [#allocation4], 1

</llo_original>
